<compile_context>
chip_gen: v7x
topology: tpu7x:2x2x1
jax: 0.10.0
libtpu: 0.0.40
codegen_flags: <defaults>
</compile_context>

<pallas_src>
import jax
import jax.numpy as jnp
from jax.experimental import pallas as pl
from jax.experimental.pallas import tpu as pltpu

EPS = 1e-5  # PyTorch BatchNorm2d default eps


def _vmem_limit_bytes():
    """Generation-aware scoped-VMEM request: ~75% of physical, capped at 96 MiB."""
    try:
        phys = int(pltpu.get_tpu_info().vmem_capacity_bytes)
    except Exception:
        phys = 64 * 1024 * 1024  # conservative (v7x-sized) fallback
    return min((phys * 3) // 4, 96 * 1024 * 1024)


# ---------------------------------------------------------------------------
# Pass 1: fused (tr-conv taps + 1x1 conv + bias + ReLU + partial BN stats)
#   Layout: channels on the sublane axis, flattened spatial on the lane axis.
# ---------------------------------------------------------------------------
def _fused_branch_kernel(up_ref, x_ref, wup_ref, bup_ref, wx_ref, bx_ref,
                         yup_ref, yx_ref, stu_ref, stx_ref):
    # up_ref : (Cu, tw)           tw = th*W lanes of the low-res grid
    # x_ref  : (Cx, 4*tw)         matching hi-res rows (2*th rows of width 2W)
    # wup_ref: (4*up_out, Cu)     rows ordered (kh, kw, co)
    # bup_ref: (4*up_out, 1)
    # wx_ref : (x_out, Cx)     bx_ref: (x_out, 1)
    # yup_ref: (4*up_out, tw)  yx_ref: (x_out, 4*tw)
    # stu_ref: (4*up_out, 2)   stx_ref: (x_out, 2)    columns = [sum, sum_sq]
    r_up = jnp.dot(wup_ref[...], up_ref[...], preferred_element_type=jnp.float32)
    r_up = jnp.maximum(r_up + bup_ref[...], 0.0)
    yup_ref[...] = r_up
    stu_ref[:, 0:1] = jnp.sum(r_up, axis=1, keepdims=True)
    stu_ref[:, 1:2] = jnp.sum(r_up * r_up, axis=1, keepdims=True)

    r_x = jnp.dot(wx_ref[...], x_ref[...], preferred_element_type=jnp.float32)
    r_x = jnp.maximum(r_x + bx_ref[...], 0.0)
    yx_ref[...] = r_x
    stx_ref[:, 0:1] = jnp.sum(r_x, axis=1, keepdims=True)
    stx_ref[:, 1:2] = jnp.sum(r_x * r_x, axis=1, keepdims=True)


def _choose_tile_h(H, W, Cu, Cx, up_out, x_out, budget):
    """Largest H-divisor tile whose padded, double-buffered VMEM footprint fits."""
    def pad8(c):
        return -(-c // 8) * 8

    def pad128(n):
        return -(-n // 128) * 128

    def bytes_for(th):
        tw, txw = th * W, 4 * th * W
        per_step = (pad8(Cu) * pad128(tw) + pad8(Cx) * pad128(txw)
                    + pad8(4 * up_out) * pad128(tw) + pad8(x_out) * pad128(txw)
                    + pad8(4 * up_out) * pad128(2) + pad8(x_out) * pad128(2))
        return 4 * 2 * per_step  # f32 bytes, x2 for BlockSpec double-buffering

    legal = [th for th in range(1, H + 1)
             if H % th == 0 and (th == H or (th * W) % 128 == 0)]
    fitting = [th for th in legal if bytes_for(th) <= budget]
    return max(fitting) if fitting else min(legal)


def _fused_branches(up_mat, x_mat, w_up, b_up, w_x, b_x, H, W, th, vmem_limit):
    N, Cu, _ = up_mat.shape
    Cx = x_mat.shape[1]
    four_up = w_up.shape[0]
    x_out = w_x.shape[0]
    nh = H // th
    tw = th * W

    return pl.pallas_call(
        _fused_branch_kernel,
        grid=(N, nh),
        in_specs=[
            pl.BlockSpec((None, Cu, tw), lambda n, i: (n, 0, i)),
            pl.BlockSpec((None, Cx, 4 * tw), lambda n, i: (n, 0, i)),
            pl.BlockSpec((four_up, Cu), lambda n, i: (0, 0)),
            pl.BlockSpec((four_up, 1), lambda n, i: (0, 0)),
            pl.BlockSpec((x_out, Cx), lambda n, i: (0, 0)),
            pl.BlockSpec((x_out, 1), lambda n, i: (0, 0)),
        ],
        out_specs=[
            pl.BlockSpec((None, four_up, tw), lambda n, i: (n, 0, i)),
            pl.BlockSpec((None, x_out, 4 * tw), lambda n, i: (n, 0, i)),
            pl.BlockSpec((None, None, four_up, 2), lambda n, i: (n, i, 0, 0)),
            pl.BlockSpec((None, None, x_out, 2), lambda n, i: (n, i, 0, 0)),
        ],
        out_shape=[
            jax.ShapeDtypeStruct((N, four_up, H * W), jnp.float32),
            jax.ShapeDtypeStruct((N, x_out, 4 * H * W), jnp.float32),
            jax.ShapeDtypeStruct((N, nh, four_up, 2), jnp.float32),
            jax.ShapeDtypeStruct((N, nh, x_out, 2), jnp.float32),
        ],
        compiler_params=pltpu.CompilerParams(
            dimension_semantics=("parallel", "parallel"),
            vmem_limit_bytes=vmem_limit,
        ),
    )(up_mat, x_mat, w_up, b_up, w_x, b_x)


# ---------------------------------------------------------------------------
# Parameter init (deterministic, synthetic)
# ---------------------------------------------------------------------------
def init_params(key, up_in, x_in, n_out):
    up_out = x_out = n_out // 2
    ks = jax.random.split(key, 6)
    w_tr = jax.random.normal(ks[0], (up_in, up_out, 2, 2), jnp.float32) * 0.1
    b_tr = jax.random.normal(ks[1], (up_out,), jnp.float32) * 0.1
    w_x = jax.random.normal(ks[2], (x_out, x_in, 1, 1), jnp.float32) * 0.1
    b_x = jax.random.normal(ks[3], (x_out,), jnp.float32) * 0.1
    gamma = 1.0 + 0.1 * jax.random.normal(ks[4], (n_out,), jnp.float32)
    beta = 0.1 * jax.random.normal(ks[5], (n_out,), jnp.float32)
    return dict(w_tr=w_tr, b_tr=b_tr, w_x=w_x, b_x=b_x, gamma=gamma, beta=beta)


# ---------------------------------------------------------------------------
# Forward
# ---------------------------------------------------------------------------
def unet_block_forward(params, up_p, x_p):
    """up_p: (N, up_in, H, W) NCHW;  x_p: (N, x_in, 2H, 2W) NCHW.
    Returns (N, n_out, 2H, 2W) NCHW."""
    N, Cu, H, W = up_p.shape
    _, Cx, Hx, Wx = x_p.shape
    assert Hx == 2 * H and Wx == 2 * W
    w_tr, b_tr = params["w_tr"], params["b_tr"]
    w_x, b_x = params["w_x"], params["b_x"]
    up_out = w_tr.shape[1]
    x_out = w_x.shape[0]

    # ---- layout plumbing + weight packing (free reshapes / tiny tensors) ----
    up_mat = up_p.reshape(N, Cu, H * W)        # NCHW -> (N, C, HW): no transpose
    x_mat = x_p.reshape(N, Cx, Hx * Wx)
    # (Cu, up_out, kh, kw) -> rows ordered (kh, kw, co), cols = ci
    w_up = jnp.transpose(w_tr, (2, 3, 1, 0)).reshape(4 * up_out, Cu)
    b_up = jnp.tile(b_tr, 4).reshape(4 * up_out, 1)
    w_x2 = w_x[:, :, 0, 0]                     # (x_out, Cx)
    b_x2 = b_x.reshape(x_out, 1)

    vmem_limit = _vmem_limit_bytes()
    th = _choose_tile_h(H, W, Cu, Cx, up_out, x_out, budget=vmem_limit // 2)

    # ---- Pallas pass: fused convs + bias + ReLU + partial BN stats ----------
    yup, yx, st_u, st_x = _fused_branches(
        up_mat, x_mat, w_up, b_up, w_x2, b_x2, H, W, th, vmem_limit)

    # ---- finalize batch statistics (tiny vectors, plain JAX) ----------------
    m_total = N * Hx * Wx
    tot_u = jnp.sum(st_u, axis=(0, 1)).reshape(4, up_out, 2).sum(axis=0)  # (up_out, 2)
    tot_x = jnp.sum(st_x, axis=(0, 1))                                    # (x_out, 2)
    sums = jnp.concatenate([tot_u[:, 0], tot_x[:, 0]])
    sumsqs = jnp.concatenate([tot_u[:, 1], tot_x[:, 1]])
    mean = sums / m_total
    var = sumsqs / m_total - mean * mean       # biased variance (training BN)
    scale = params["gamma"] * jax.lax.rsqrt(var + EPS)
    shift = params["beta"] - mean * scale

    # ---- epilogue: BN affine fused into the single relayout/concat pass -----
    # TODO(synk): the stride-2 tap interleave + channel concat is a pure layout
    # permutation; it is left to one fused XLA pass (the broadcast FMA for the
    # BN affine fuses into it for free), so the big tensor gets exactly one
    # read + one write after the Pallas pass.
    sc_u, sh_u = scale[:up_out], shift[:up_out]
    sc_x, sh_x = scale[up_out:], shift[up_out:]
    zup = (yup.reshape(N, 2, 2, up_out, H, W)
           * sc_u[None, None, None, :, None, None]
           + sh_u[None, None, None, :, None, None])
    out_up = jnp.transpose(zup, (0, 3, 4, 1, 5, 2)).reshape(N, up_out, Hx, Wx)
    out_x = (yx.reshape(N, x_out, Hx, Wx)
             * sc_x[None, :, None, None] + sh_x[None, :, None, None])
    return jnp.concatenate([out_up, out_x], axis=1)


# ---------------------------------------------------------------------------
# Pure-JAX reference (for correctness check only)
# ---------------------------------------------------------------------------
def unet_block_ref(params, up_p, x_p):
    N, Cu, H, W = up_p.shape
    w_tr, b_tr = params["w_tr"], params["b_tr"]
    w_x, b_x = params["w_x"], params["b_x"]
    up_out = w_tr.shape[1]
    t = jnp.einsum("nchw,cokl->nohkwl", up_p, w_tr).reshape(N, up_out, 2 * H, 2 * W)
    t = t + b_tr[None, :, None, None]
    xc = jnp.einsum("nchw,oc->nohw", x_p, w_x[:, :, 0, 0]) + b_x[None, :, None, None]
    cat = jnp.concatenate([t, xc], axis=1)
    r = jnp.maximum(cat, 0.0)
    mean = jnp.mean(r, axis=(0, 2, 3), keepdims=True)
    var = jnp.mean((r - mean) ** 2, axis=(0, 2, 3), keepdims=True)
    gamma = params["gamma"][None, :, None, None]
    beta = params["beta"][None, :, None, None]
    return (r - mean) * jax.lax.rsqrt(var + EPS) * gamma + beta


# ---------------------------------------------------------------------------
if __name__ == "__main__":
    up_in, x_in, n_out = 4, 3, 8
    N, H, W = 2, 8, 8                 # up_p spatial; x_p is (2H, 2W) = (16, 16)

    key = jax.random.PRNGKey(0)
    k_par, k_up, k_x = jax.random.split(key, 3)
    params = init_params(k_par, up_in, x_in, n_out)
    up_p = jax.random.normal(k_up, (N, up_in, H, W), jnp.float32)
    x_p = jax.random.normal(k_x, (N, x_in, 2 * H, 2 * W), jnp.float32)

    fwd = jax.jit(unet_block_forward)
    out = jax.block_until_ready(fwd(params, up_p, x_p))

    ref = unet_block_ref(params, up_p, x_p)
    assert out.shape == (N, n_out, 2 * H, 2 * W), out.shape
    assert jnp.allclose(out, ref, rtol=1e-4, atol=1e-4), float(jnp.max(jnp.abs(out - ref)))

    print("KERNEL_OK")
</pallas_src>

<mosaic_0001>
module attributes {stable_mosaic.version = 11 : i64} {
  func.func @_fused_branch_kernel(%arg0: i32, %arg1: i32, %arg2: memref<1x4x64xf32, #tpu.memory_space<vmem>>, %arg3: memref<1x3x256xf32, #tpu.memory_space<vmem>>, %arg4: memref<16x4xf32, #tpu.memory_space<vmem>>, %arg5: memref<16x1xf32, #tpu.memory_space<vmem>>, %arg6: memref<4x3xf32, #tpu.memory_space<vmem>>, %arg7: memref<4x1xf32, #tpu.memory_space<vmem>>, %arg8: memref<1x16x64xf32, #tpu.memory_space<vmem>>, %arg9: memref<1x4x256xf32, #tpu.memory_space<vmem>>, %arg10: memref<1x1x16x2xf32, #tpu.memory_space<vmem>>, %arg11: memref<1x1x4x2xf32, #tpu.memory_space<vmem>>) attributes {dimension_semantics = [#tpu.dimension_semantics<parallel>, #tpu.dimension_semantics<parallel>], iteration_bounds = array<i64: 2, 1>, scalar_prefetch = 0 : i64, scratch_operands = 0 : i64, tpu.core_type = #tpu.core_type<tc>, window_params = [{transform_indices = @transform_0, window_bounds = array<i64: 1, 4, 64>}, {transform_indices = @transform_1, window_bounds = array<i64: 1, 3, 256>}, {pipeline_mode = #tpu.pipeline_mode<synchronous>, transform_indices = @transform_2, window_bounds = array<i64: 16, 4>}, {pipeline_mode = #tpu.pipeline_mode<synchronous>, transform_indices = @transform_3, window_bounds = array<i64: 16, 1>}, {pipeline_mode = #tpu.pipeline_mode<synchronous>, transform_indices = @transform_4, window_bounds = array<i64: 4, 3>}, {pipeline_mode = #tpu.pipeline_mode<synchronous>, transform_indices = @transform_5, window_bounds = array<i64: 4, 1>}, {transform_indices = @transform_6, window_bounds = array<i64: 1, 16, 64>}, {transform_indices = @transform_7, window_bounds = array<i64: 1, 4, 256>}, {transform_indices = @transform_8, window_bounds = array<i64: 1, 1, 16, 2>}, {transform_indices = @transform_9, window_bounds = array<i64: 1, 1, 4, 2>}]} {
    %c0 = arith.constant 0 : index
    %c0_0 = arith.constant 0 : index
    %0 = vector.load %arg4[%c0, %c0_0] : memref<16x4xf32, #tpu.memory_space<vmem>>, vector<16x4xf32>
    %c0_1 = arith.constant 0 : index
    %c0_2 = arith.constant 0 : index
    %c0_3 = arith.constant 0 : index
    %1 = vector.load %arg2[%c0_1, %c0_2, %c0_3] : memref<1x4x64xf32, #tpu.memory_space<vmem>>, vector<1x4x64xf32>
    %2 = vector.shape_cast %1 : vector<1x4x64xf32> to vector<4x64xf32>
    %cst = arith.constant dense<0.000000e+00> : vector<16x64xf32>
    %3 = tpu.matmul %0, %2, %cst {dimension_numbers = #tpu.dot_dimension_numbers<[1], [0], [0], [1], [0, 0, 1, 1], [], []>} : vector<16x4xf32>, vector<4x64xf32>, vector<16x64xf32> -> vector<16x64xf32>
    %c0_4 = arith.constant 0 : index
    %c0_5 = arith.constant 0 : index
    %4 = vector.load %arg5[%c0_4, %c0_5] : memref<16x1xf32, #tpu.memory_space<vmem>>, vector<16x1xf32>
    %5 = vector.broadcast %4 : vector<16x1xf32> to vector<16x64xf32>
    %6 = arith.addf %3, %5 : vector<16x64xf32>
    %cst_6 = arith.constant 0.000000e+00 : f32
    %7 = vector.broadcast %cst_6 : f32 to vector<16x64xf32>
    %8 = arith.maximumf %6, %7 : vector<16x64xf32>
    %c0_7 = arith.constant 0 : index
    %c0_8 = arith.constant 0 : index
    %c0_9 = arith.constant 0 : index
    %9 = vector.load %arg8[%c0_7, %c0_8, %c0_9] : memref<1x16x64xf32, #tpu.memory_space<vmem>>, vector<1x16x64xf32>
    %10 = vector.shape_cast %9 : vector<1x16x64xf32> to vector<16x64xf32>
    %11 = vector.shape_cast %8 : vector<16x64xf32> to vector<1x16x64xf32>
    tpu.vector_store %arg8[%c0_7, %c0_8, %c0_9], %11 {strides = array<i32>} : memref<1x16x64xf32, #tpu.memory_space<vmem>>, vector<1x16x64xf32>,
    %cst_10 = arith.constant dense<0.000000e+00> : vector<16xf32>
    %12 = vector.multi_reduction <add>, %8, %cst_10 [1] : vector<16x64xf32> to vector<16xf32>
    %13 = vector.shape_cast %12 : vector<16xf32> to vector<16x1xf32>
    %c0_11 = arith.constant 0 : index
    %c0_12 = arith.constant 0 : index
    %c0_13 = arith.constant 0 : index
    %c0_14 = arith.constant 0 : index
    %14 = vector.load %arg10[%c0_11, %c0_12, %c0_13, %c0_14] : memref<1x1x16x2xf32, #tpu.memory_space<vmem>>, vector<1x1x16x1xf32>
    %15 = vector.shape_cast %14 : vector<1x1x16x1xf32> to vector<16x1xf32>
    %16 = vector.shape_cast %13 : vector<16x1xf32> to vector<1x1x16x1xf32>
    tpu.vector_store %arg10[%c0_11, %c0_12, %c0_13, %c0_14], %16 {strides = array<i32>} : memref<1x1x16x2xf32, #tpu.memory_space<vmem>>, vector<1x1x16x1xf32>,
    %17 = arith.mulf %8, %8 : vector<16x64xf32>
    %cst_15 = arith.constant dense<0.000000e+00> : vector<16xf32>
    %18 = vector.multi_reduction <add>, %17, %cst_15 [1] : vector<16x64xf32> to vector<16xf32>
    %19 = vector.shape_cast %18 : vector<16xf32> to vector<16x1xf32>
    %c0_16 = arith.constant 0 : index
    %c0_17 = arith.constant 0 : index
    %c0_18 = arith.constant 0 : index
    %c1 = arith.constant 1 : index
    %20 = vector.load %arg10[%c0_16, %c0_17, %c0_18, %c1] : memref<1x1x16x2xf32, #tpu.memory_space<vmem>>, vector<1x1x16x1xf32>
    %21 = vector.shape_cast %20 : vector<1x1x16x1xf32> to vector<16x1xf32>
    %22 = vector.shape_cast %19 : vector<16x1xf32> to vector<1x1x16x1xf32>
    tpu.vector_store %arg10[%c0_16, %c0_17, %c0_18, %c1], %22 {strides = array<i32>} : memref<1x1x16x2xf32, #tpu.memory_space<vmem>>, vector<1x1x16x1xf32>,
    %c0_19 = arith.constant 0 : index
    %c0_20 = arith.constant 0 : index
    %23 = vector.load %arg6[%c0_19, %c0_20] : memref<4x3xf32, #tpu.memory_space<vmem>>, vector<4x3xf32>
    %c0_21 = arith.constant 0 : index
    %c0_22 = arith.constant 0 : index
    %c0_23 = arith.constant 0 : index
    %24 = vector.load %arg3[%c0_21, %c0_22, %c0_23] : memref<1x3x256xf32, #tpu.memory_space<vmem>>, vector<1x3x256xf32>
    %25 = vector.shape_cast %24 : vector<1x3x256xf32> to vector<3x256xf32>
    %cst_24 = arith.constant dense<0.000000e+00> : vector<4x256xf32>
    %26 = tpu.matmul %23, %25, %cst_24 {dimension_numbers = #tpu.dot_dimension_numbers<[1], [0], [0], [1], [0, 0, 1, 1], [], []>} : vector<4x3xf32>, vector<3x256xf32>, vector<4x256xf32> -> vector<4x256xf32>
    %c0_25 = arith.constant 0 : index
    %c0_26 = arith.constant 0 : index
    %27 = vector.load %arg7[%c0_25, %c0_26] : memref<4x1xf32, #tpu.memory_space<vmem>>, vector<4x1xf32>
    %28 = vector.broadcast %27 : vector<4x1xf32> to vector<4x256xf32>
    %29 = arith.addf %26, %28 : vector<4x256xf32>
    %cst_27 = arith.constant 0.000000e+00 : f32
    %30 = vector.broadcast %cst_27 : f32 to vector<4x256xf32>
    %31 = arith.maximumf %29, %30 : vector<4x256xf32>
    %c0_28 = arith.constant 0 : index
    %c0_29 = arith.constant 0 : index
    %c0_30 = arith.constant 0 : index
    %32 = vector.load %arg9[%c0_28, %c0_29, %c0_30] : memref<1x4x256xf32, #tpu.memory_space<vmem>>, vector<1x4x256xf32>
    %33 = vector.shape_cast %32 : vector<1x4x256xf32> to vector<4x256xf32>
    %34 = vector.shape_cast %31 : vector<4x256xf32> to vector<1x4x256xf32>
    tpu.vector_store %arg9[%c0_28, %c0_29, %c0_30], %34 {strides = array<i32>} : memref<1x4x256xf32, #tpu.memory_space<vmem>>, vector<1x4x256xf32>,
    %cst_31 = arith.constant dense<0.000000e+00> : vector<4xf32>
    %35 = vector.multi_reduction <add>, %31, %cst_31 [1] : vector<4x256xf32> to vector<4xf32>
    %36 = vector.shape_cast %35 : vector<4xf32> to vector<4x1xf32>
    %c0_32 = arith.constant 0 : index
    %c0_33 = arith.constant 0 : index
    %c0_34 = arith.constant 0 : index
    %c0_35 = arith.constant 0 : index
    %37 = vector.load %arg11[%c0_32, %c0_33, %c0_34, %c0_35] : memref<1x1x4x2xf32, #tpu.memory_space<vmem>>, vector<1x1x4x1xf32>
    %38 = vector.shape_cast %37 : vector<1x1x4x1xf32> to vector<4x1xf32>
    %39 = vector.shape_cast %36 : vector<4x1xf32> to vector<1x1x4x1xf32>
    tpu.vector_store %arg11[%c0_32, %c0_33, %c0_34, %c0_35], %39 {strides = array<i32>} : memref<1x1x4x2xf32, #tpu.memory_space<vmem>>, vector<1x1x4x1xf32>,
    %40 = arith.mulf %31, %31 : vector<4x256xf32>
    %cst_36 = arith.constant dense<0.000000e+00> : vector<4xf32>
    %41 = vector.multi_reduction <add>, %40, %cst_36 [1] : vector<4x256xf32> to vector<4xf32>
    %42 = vector.shape_cast %41 : vector<4xf32> to vector<4x1xf32>
    %c0_37 = arith.constant 0 : index
    %c0_38 = arith.constant 0 : index
    %c0_39 = arith.constant 0 : index
    %c1_40 = arith.constant 1 : index
    %43 = vector.load %arg11[%c0_37, %c0_38, %c0_39, %c1_40] : memref<1x1x4x2xf32, #tpu.memory_space<vmem>>, vector<1x1x4x1xf32>
    %44 = vector.shape_cast %43 : vector<1x1x4x1xf32> to vector<4x1xf32>
    %45 = vector.shape_cast %42 : vector<4x1xf32> to vector<1x1x4x1xf32>
    tpu.vector_store %arg11[%c0_37, %c0_38, %c0_39, %c1_40], %45 {strides = array<i32>} : memref<1x1x4x2xf32, #tpu.memory_space<vmem>>, vector<1x1x4x1xf32>,
    return
  }
  func.func @transform_0(%arg0: i32, %arg1: i32) -> (i32, i32, i32) {
    %c0_i32 = arith.constant 0 : i32
    %c0_i32_0 = arith.constant 0 : i32
    return %arg0, %c0_i32, %arg1 : i32, i32, i32
  }
  func.func @transform_1(%arg0: i32, %arg1: i32) -> (i32, i32, i32) {
    %c0_i32 = arith.constant 0 : i32
    %c0_i32_0 = arith.constant 0 : i32
    return %arg0, %c0_i32, %arg1 : i32, i32, i32
  }
  func.func @transform_2(%arg0: i32, %arg1: i32) -> (i32, i32) {
    %c0_i32 = arith.constant 0 : i32
    %c0_i32_0 = arith.constant 0 : i32
    %c0_i32_1 = arith.constant 0 : i32
    return %c0_i32, %c0_i32_0 : i32, i32
  }
  func.func @transform_3(%arg0: i32, %arg1: i32) -> (i32, i32) {
    %c0_i32 = arith.constant 0 : i32
    %c0_i32_0 = arith.constant 0 : i32
    %c0_i32_1 = arith.constant 0 : i32
    return %c0_i32, %c0_i32_0 : i32, i32
  }
  func.func @transform_4(%arg0: i32, %arg1: i32) -> (i32, i32) {
    %c0_i32 = arith.constant 0 : i32
    %c0_i32_0 = arith.constant 0 : i32
    %c0_i32_1 = arith.constant 0 : i32
    return %c0_i32, %c0_i32_0 : i32, i32
  }
  func.func @transform_5(%arg0: i32, %arg1: i32) -> (i32, i32) {
    %c0_i32 = arith.constant 0 : i32
    %c0_i32_0 = arith.constant 0 : i32
    %c0_i32_1 = arith.constant 0 : i32
    return %c0_i32, %c0_i32_0 : i32, i32
  }
  func.func @transform_6(%arg0: i32, %arg1: i32) -> (i32, i32, i32) {
    %c0_i32 = arith.constant 0 : i32
    %c0_i32_0 = arith.constant 0 : i32
    return %arg0, %c0_i32, %arg1 : i32, i32, i32
  }
  func.func @transform_7(%arg0: i32, %arg1: i32) -> (i32, i32, i32) {
    %c0_i32 = arith.constant 0 : i32
    %c0_i32_0 = arith.constant 0 : i32
    return %arg0, %c0_i32, %arg1 : i32, i32, i32
  }
  func.func @transform_8(%arg0: i32, %arg1: i32) -> (i32, i32, i32, i32) {
    %c0_i32 = arith.constant 0 : i32
    %c0_i32_0 = arith.constant 0 : i32
    %c0_i32_1 = arith.constant 0 : i32
    return %arg0, %arg1, %c0_i32, %c0_i32_0 : i32, i32, i32, i32
  }
  func.func @transform_9(%arg0: i32, %arg1: i32) -> (i32, i32, i32, i32) {
    %c0_i32 = arith.constant 0 : i32
    %c0_i32_0 = arith.constant 0 : i32
    %c0_i32_1 = arith.constant 0 : i32
    return %arg0, %arg1, %c0_i32, %c0_i32_0 : i32, i32, i32, i32
  }
}

</mosaic_0001>

<llo_original>
// kernel: tile.8
$region0: #{tile.8}
  #allocation0 [shape = 's32[1]{0}', space=sflag, size = 0x4, scoped, tag = 'scoped memory for tile.8']
  %s0 = inlined_call_operand.vmem [shape: f32[4], index: 0, kind: input, shape index: {}]
  %s1 = inlined_call_operand.vmem [shape: f32[4,4], index: 1, kind: output, shape index: {}]
  // Predicated region
  $region2: #{tile.8} parent=0 // pred_check
    _
  $region3: #{tile.8} parent=0 // pred_check_branch
    %3 = sbr.rel (0) target = $region5
  $region4: #{tile.8} parent=0 // pred_region
    _
  $region5: #{tile.8} parent=0 // pred_fallthru
    _
  %v4 = vld [vmem:[%s0] ss:$0 sm:$0xff]
  %5 = vst [vmem:[%s1] sm:$0xf] %v4

// kernel: tile.0
$region0: #{tile.0}
  %s0 = inlined_call_operand.vmem [shape: f32[4,4], index: 0, kind: input, shape index: {}]
  %s1 = inlined_call_operand.vmem [shape: f32[16,1], index: 1, kind: output, shape index: {}]
  $region1: #{tile.0} parent=0
    #allocation0 [shape = 'u8[4096]{0}', space=vmem, size = 0x1000, scoped, tag = 'scoped mem for input reshape']
    %s3 = sshllo.u32 0, 4
    %v4 = vld [vmem:[%s0] sm:%s3]
    %5 = vst [vmem:[#allocation0] sm:%s3] %v4
    %v6 = vld [vmem:[#allocation0] sm:$0xf]
    %vm7 = vcmask 7168
    %8 = vst.msk [vmem:[%s1] ss:$4 sm:$0xf] %vm7, %v6
    %v9 = vld [vmem:[#allocation0] sm:$0xf]
    %10 = vrot.lane.b32.xlu0 %v9, 127
    %v11 = vpop.permute.xlu0 %10
    %vm12 = vcmask 7168
    %s13 = scalar_lea.vmem %s1, 1
    %14 = vst.msk [vmem:[%s13] ss:$4 sm:$0xf] %vm12, %v11
    %v15 = vld [vmem:[#allocation0] sm:$0xf]
    %16 = vrot.lane.b32.xlu0 %v15, 126
    %v17 = vpop.permute.xlu0 %16
    %vm18 = vcmask 7168
    %s19 = scalar_lea.vmem %s1, 2
    %20 = vst.msk [vmem:[%s19] ss:$4 sm:$0xf] %vm18, %v17
    %v21 = vld [vmem:[#allocation0] sm:$0xf]
    %22 = vrot.lane.b32.xlu0 %v21, 125
    %v23 = vpop.permute.xlu0 %22
    %vm24 = vcmask 7168
    %s25 = scalar_lea.vmem %s1, 3
    %26 = vst.msk [vmem:[%s25] ss:$4 sm:$0xf] %vm24, %v23

// kernel: unet_block_forward.1
$region0: #{unet_block_forward.1}
  #allocation0 [shape = 'u32[]', space=smem, size = 0x4, offset = 0x4, fixed_abs, tag = 'smem constant byte address 0x4 - core index']
  #allocation1 [shape = 'u32[144,128]{1,0:T(1,128)}', space=vmem, size = 0x12000, scoped, tag = 'internal scratch']
  %s0 = inlined_call_operand.vmem [shape: f32[2,4,64], index: 0, kind: input, shape index: {}]
  %s1 = inlined_call_operand.vmem [shape: f32[2,3,256], index: 1, kind: input, shape index: {}]
  %s2 = inlined_call_operand.vmem [shape: f32[16,4], index: 2, kind: input, shape index: {}]
  %s3 = inlined_call_operand.vmem [shape: f32[16,1], index: 3, kind: input, shape index: {}]
  %s4 = inlined_call_operand.vmem [shape: f32[4,3], index: 4, kind: input, shape index: {}]
  %s5 = inlined_call_operand.vmem [shape: f32[4,1], index: 5, kind: input, shape index: {}]
  %s6 = inlined_call_operand.vmem [shape: f32[2,16,64], index: 6, kind: output, shape index: {0}]
  %s7 = inlined_call_operand.vmem [shape: f32[2,4,256], index: 7, kind: output, shape index: {1}]
  %s8 = inlined_call_operand.vmem [shape: f32[2,1,16,2], index: 8, kind: output, shape index: {2}]
  %s9 = inlined_call_operand.vmem [shape: f32[2,1,4,2], index: 9, kind: output, shape index: {3}]
  %10 = xla_tuple %s6, %s7, %s8, %s9
  %s11 = sld [smem:[#allocation0]]
  $region81: #{unet_block_forward.1} parent=0
    _
  %s13 = ssub.s32 1, %s11
  %s14 = scalar_select 0, %s13, %s11
  loop: start=0, step=1, limit=4
  $region2: #{unet_block_forward.1} parent=0 // loop_pre_header
    _
  $region3: #{unet_block_forward.1} parent=0 // loop_header
    %s16 = sphi 0, %s20
    %p17 = scmp.ge.s32.totalorder %s16, 4
    %s23 = sphi 0, %s35
    %s24 = sphi 0, %s31
    %s25 = sphi 0, %s23
    %s26 = sphi 0, %s24
    %s27 = sphi 0, %s25
    %s28 = sphi 0, %s26
    %s40 = sphi 0, %s42
    %s43 = sphi 0, %s40
    %s44 = sphi 0, %s43
    %s60 = sphi 0, %s44
    %s68 = sphi 0, %s70
    %s71 = sphi 0, %s68
    %s72 = sphi 0, %s71
    %s88 = sphi 0, %s72
    %s92 = sphi 0, %s92
    %s94 = sphi 0, %s92
    %s95 = sphi 0, %s94
    %s109 = sphi 0, %s95
    %s113 = sphi 0, %s113
    %s115 = sphi 0, %s113
    %s116 = sphi 0, %s115
    %s130 = sphi 0, %s116
    %s134 = sphi 0, %s134
    %s136 = sphi 0, %s134
    %s137 = sphi 0, %s136
    %s151 = sphi 0, %s137
    %s155 = sphi 0, %s155
    %s157 = sphi 0, %s155
    %s158 = sphi 0, %s157
    %s172 = sphi 0, %s158
    %s180 = sphi 0, %s182
    %s183 = sphi 0, %s180
    %s184 = sphi 0, %s183
    %s200 = sphi 0, %s184
    %s208 = sphi 0, %s210
    %s211 = sphi 0, %s208
    %s212 = sphi 0, %s211
    %s228 = sphi 0, %s212
    %s236 = sphi 0, %s238
    %s239 = sphi 0, %s236
    %s240 = sphi 0, %s239
    %s256 = sphi 0, %s240
    %s264 = sphi 0, %s266
    %s267 = sphi 0, %s264
    %s268 = sphi 0, %s267
    %s284 = sphi 0, %s268
  $region4: #{unet_block_forward.1} parent=0 // loop_header_branch
    %19 = sbr.rel (%p17) target = $region8
  $region5: #{unet_block_forward.1} parent=0 // loop_body
    %s21 = ssub.s32 %s16, 1
    %s22 = ssub.s32 %s16, 2
    %s29 = sadd.s32 1, %s24
    %p30 = scmp.ge.s32.totalorder %s29, 1
    %s31 = scalar_select %p30, 0, %s29
    %s32 = sadd.s32 1, %s23
    %s33 = scalar_select %p30, %s32, %s23
    %p34 = scmp.ge.s32.totalorder %s33, 2
    %s35 = scalar_select %p34, 0, %s33
    %s36 = ssub.s32 %s23, %s35
    %s37 = ssub.s32 %s24, %s31
    %s38 = sor.u32 %s36, %s37
    %p39 = scmp.eq.s32.totalorder %s38, 0
    %s41 = sadd.s32 %s40, 1
    %s42 = scalar_select %p39, %s40, %s41
    %p45 = pneg %p39
    %p46 = scmp.eq.s32.totalorder %s16, 1
    %p47 = por %p45, %p46
    %p48 = scmp.ne.s32.totalorder %s40, %s43
    %p49 = scmp.eq.s32.totalorder %s16, 0
    %p50 = por %p48, %p49
    %p51 = scmp.ne.s32.totalorder %s40, %s43
    %p52 = scmp.eq.s32.totalorder %s21, 1
    %p53 = por %p51, %p52
    %p54 = scmp.ne.s32.totalorder %s43, %s44
    %p55 = scmp.eq.s32.totalorder %s21, 0
    %p56 = por %p54, %p55
    %p57 = scmp.ne.s32.totalorder %s43, %s44
    %p58 = scmp.eq.s32.totalorder %s22, 1
    %p59 = por %p57, %p58
    %p61 = scmp.ne.s32.totalorder %s44, %s60
    %p62 = scmp.eq.s32.totalorder %s22, 0
    %p63 = por %p61, %p62
    %s64 = ssub.s32 %s23, %s35
    %s65 = ssub.s32 %s24, %s31
    %s66 = sor.u32 %s64, %s65
    %p67 = scmp.eq.s32.totalorder %s66, 0
    %s69 = sadd.s32 %s68, 1
    %s70 = scalar_select %p67, %s68, %s69
    %p73 = pneg %p67
    %p74 = scmp.eq.s32.totalorder %s16, 1
    %p75 = por %p73, %p74
    %p76 = scmp.ne.s32.totalorder %s68, %s71
    %p77 = scmp.eq.s32.totalorder %s16, 0
    %p78 = por %p76, %p77
    %p79 = scmp.ne.s32.totalorder %s68, %s71
    %p80 = scmp.eq.s32.totalorder %s21, 1
    %p81 = por %p79, %p80
    %p82 = scmp.ne.s32.totalorder %s71, %s72
    %p83 = scmp.eq.s32.totalorder %s21, 0
    %p84 = por %p82, %p83
    %p85 = scmp.ne.s32.totalorder %s71, %s72
    %p86 = scmp.eq.s32.totalorder %s22, 1
    %p87 = por %p85, %p86
    %p89 = scmp.ne.s32.totalorder %s72, %s88
    %p90 = scmp.eq.s32.totalorder %s22, 0
    %p91 = por %p89, %p90
    %s93 = sadd.s32 %s92, 1
    %p96 = scmp.eq.s32.totalorder %s16, 1
    %p97 = scmp.ne.s32.totalorder %s92, %s94
    %p98 = scmp.eq.s32.totalorder %s16, 0
    %p99 = por %p97, %p98
    %p100 = scmp.ne.s32.totalorder %s92, %s94
    %p101 = scmp.eq.s32.totalorder %s21, 1
    %p102 = por %p100, %p101
    %p103 = scmp.ne.s32.totalorder %s94, %s95
    %p104 = scmp.eq.s32.totalorder %s21, 0
    %p105 = por %p103, %p104
    %p106 = scmp.ne.s32.totalorder %s94, %s95
    %p107 = scmp.eq.s32.totalorder %s22, 1
    %p108 = por %p106, %p107
    %p110 = scmp.ne.s32.totalorder %s95, %s109
    %p111 = scmp.eq.s32.totalorder %s22, 0
    %p112 = por %p110, %p111
    %s114 = sadd.s32 %s113, 1
    %p117 = scmp.eq.s32.totalorder %s16, 1
    %p118 = scmp.ne.s32.totalorder %s113, %s115
    %p119 = scmp.eq.s32.totalorder %s16, 0
    %p120 = por %p118, %p119
    %p121 = scmp.ne.s32.totalorder %s113, %s115
    %p122 = scmp.eq.s32.totalorder %s21, 1
    %p123 = por %p121, %p122
    %p124 = scmp.ne.s32.totalorder %s115, %s116
    %p125 = scmp.eq.s32.totalorder %s21, 0
    %p126 = por %p124, %p125
    %p127 = scmp.ne.s32.totalorder %s115, %s116
    %p128 = scmp.eq.s32.totalorder %s22, 1
    %p129 = por %p127, %p128
    %p131 = scmp.ne.s32.totalorder %s116, %s130
    %p132 = scmp.eq.s32.totalorder %s22, 0
    %p133 = por %p131, %p132
    %s135 = sadd.s32 %s134, 1
    %p138 = scmp.eq.s32.totalorder %s16, 1
    %p139 = scmp.ne.s32.totalorder %s134, %s136
    %p140 = scmp.eq.s32.totalorder %s16, 0
    %p141 = por %p139, %p140
    %p142 = scmp.ne.s32.totalorder %s134, %s136
    %p143 = scmp.eq.s32.totalorder %s21, 1
    %p144 = por %p142, %p143
    %p145 = scmp.ne.s32.totalorder %s136, %s137
    %p146 = scmp.eq.s32.totalorder %s21, 0
    %p147 = por %p145, %p146
    %p148 = scmp.ne.s32.totalorder %s136, %s137
    %p149 = scmp.eq.s32.totalorder %s22, 1
    %p150 = por %p148, %p149
    %p152 = scmp.ne.s32.totalorder %s137, %s151
    %p153 = scmp.eq.s32.totalorder %s22, 0
    %p154 = por %p152, %p153
    %s156 = sadd.s32 %s155, 1
    %p159 = scmp.eq.s32.totalorder %s16, 1
    %p160 = scmp.ne.s32.totalorder %s155, %s157
    %p161 = scmp.eq.s32.totalorder %s16, 0
    %p162 = por %p160, %p161
    %p163 = scmp.ne.s32.totalorder %s155, %s157
    %p164 = scmp.eq.s32.totalorder %s21, 1
    %p165 = por %p163, %p164
    %p166 = scmp.ne.s32.totalorder %s157, %s158
    %p167 = scmp.eq.s32.totalorder %s21, 0
    %p168 = por %p166, %p167
    %p169 = scmp.ne.s32.totalorder %s157, %s158
    %p170 = scmp.eq.s32.totalorder %s22, 1
    %p171 = por %p169, %p170
    %p173 = scmp.ne.s32.totalorder %s158, %s172
    %p174 = scmp.eq.s32.totalorder %s22, 0
    %p175 = por %p173, %p174
    %s176 = ssub.s32 %s23, %s35
    %s177 = ssub.s32 %s24, %s31
    %s178 = sor.u32 %s176, %s177
    %p179 = scmp.eq.s32.totalorder %s178, 0
    %s181 = sadd.s32 %s180, 1
    %s182 = scalar_select %p179, %s180, %s181
    %p185 = pneg %p179
    %p186 = scmp.eq.s32.totalorder %s16, 1
    %p187 = por %p185, %p186
    %p188 = scmp.ne.s32.totalorder %s180, %s183
    %p189 = scmp.eq.s32.totalorder %s16, 0
    %p190 = por %p188, %p189
    %p191 = scmp.ne.s32.totalorder %s180, %s183
    %p192 = scmp.eq.s32.totalorder %s21, 1
    %p193 = por %p191, %p192
    %p194 = scmp.ne.s32.totalorder %s183, %s184
    %p195 = scmp.eq.s32.totalorder %s21, 0
    %p196 = por %p194, %p195
    %p197 = scmp.ne.s32.totalorder %s183, %s184
    %p198 = scmp.eq.s32.totalorder %s22, 1
    %p199 = por %p197, %p198
    %p201 = scmp.ne.s32.totalorder %s184, %s200
    %p202 = scmp.eq.s32.totalorder %s22, 0
    %p203 = por %p201, %p202
    %s204 = ssub.s32 %s23, %s35
    %s205 = ssub.s32 %s24, %s31
    %s206 = sor.u32 %s204, %s205
    %p207 = scmp.eq.s32.totalorder %s206, 0
    %s209 = sadd.s32 %s208, 1
    %s210 = scalar_select %p207, %s208, %s209
    %p213 = pneg %p207
    %p214 = scmp.eq.s32.totalorder %s16, 1
    %p215 = por %p213, %p214
    %p216 = scmp.ne.s32.totalorder %s208, %s211
    %p217 = scmp.eq.s32.totalorder %s16, 0
    %p218 = por %p216, %p217
    %p219 = scmp.ne.s32.totalorder %s208, %s211
    %p220 = scmp.eq.s32.totalorder %s21, 1
    %p221 = por %p219, %p220
    %p222 = scmp.ne.s32.totalorder %s211, %s212
    %p223 = scmp.eq.s32.totalorder %s21, 0
    %p224 = por %p222, %p223
    %p225 = scmp.ne.s32.totalorder %s211, %s212
    %p226 = scmp.eq.s32.totalorder %s22, 1
    %p227 = por %p225, %p226
    %p229 = scmp.ne.s32.totalorder %s212, %s228
    %p230 = scmp.eq.s32.totalorder %s22, 0
    %p231 = por %p229, %p230
    %s232 = ssub.s32 %s23, %s35
    %s233 = ssub.s32 %s24, %s31
    %s234 = sor.u32 %s232, %s233
    %p235 = scmp.eq.s32.totalorder %s234, 0
    %s237 = sadd.s32 %s236, 1
    %s238 = scalar_select %p235, %s236, %s237
    %p241 = pneg %p235
    %p242 = scmp.eq.s32.totalorder %s16, 1
    %p243 = por %p241, %p242
    %p244 = scmp.ne.s32.totalorder %s236, %s239
    %p245 = scmp.eq.s32.totalorder %s16, 0
    %p246 = por %p244, %p245
    %p247 = scmp.ne.s32.totalorder %s236, %s239
    %p248 = scmp.eq.s32.totalorder %s21, 1
    %p249 = por %p247, %p248
    %p250 = scmp.ne.s32.totalorder %s239, %s240
    %p251 = scmp.eq.s32.totalorder %s21, 0
    %p252 = por %p250, %p251
    %p253 = scmp.ne.s32.totalorder %s239, %s240
    %p254 = scmp.eq.s32.totalorder %s22, 1
    %p255 = por %p253, %p254
    %p257 = scmp.ne.s32.totalorder %s240, %s256
    %p258 = scmp.eq.s32.totalorder %s22, 0
    %p259 = por %p257, %p258
    %s260 = ssub.s32 %s23, %s35
    %s261 = ssub.s32 %s24, %s31
    %s262 = sor.u32 %s260, %s261
    %p263 = scmp.eq.s32.totalorder %s262, 0
    %s265 = sadd.s32 %s264, 1
    %s266 = scalar_select %p263, %s264, %s265
    %p269 = pneg %p263
    %p270 = scmp.eq.s32.totalorder %s16, 1
    %p271 = por %p269, %p270
    %p272 = scmp.ne.s32.totalorder %s264, %s267
    %p273 = scmp.eq.s32.totalorder %s16, 0
    %p274 = por %p272, %p273
    %p275 = scmp.ne.s32.totalorder %s264, %s267
    %p276 = scmp.eq.s32.totalorder %s21, 1
    %p277 = por %p275, %p276
    %p278 = scmp.ne.s32.totalorder %s267, %s268
    %p279 = scmp.eq.s32.totalorder %s21, 0
    %p280 = por %p278, %p279
    %p281 = scmp.ne.s32.totalorder %s267, %s268
    %p282 = scmp.eq.s32.totalorder %s22, 1
    %p283 = por %p281, %p282
    %p285 = scmp.ne.s32.totalorder %s268, %s284
    %p286 = scmp.eq.s32.totalorder %s22, 0
    %p287 = por %p285, %p286
    %p288 = scmp.le.s32.totalorder 1, %s16
    %p289 = scmp.lt.s32.totalorder %s16, 3
    %p290 = pnand %p288, %p289
    %p291 = pneg %p290
    // Predicated region
    $region9: #{unet_block_forward.1} parent=5 // pred_check
      _
    $region10: #{unet_block_forward.1} parent=5 // pred_check_branch
      %293 = sbr.rel (%p290) target = $region12
    $region11: #{unet_block_forward.1} parent=5 // pred_region
      %s294 = ssub.s32 %s16, 1
      // Predicated region
      $region13: #{unet_block_forward.1} parent=11 // pred_check
        %p295 = pneg %p105
      $region14: #{unet_block_forward.1} parent=11 // pred_check_branch
        %297 = sbr.rel (%p295) target = $region16
      $region15: #{unet_block_forward.1} parent=11 // pred_region
        _
      $region16: #{unet_block_forward.1} parent=11 // pred_fallthru
        _
      // Predicated region
      $region17: #{unet_block_forward.1} parent=11 // pred_check
        %p298 = pneg %p126
      $region18: #{unet_block_forward.1} parent=11 // pred_check_branch
        %300 = sbr.rel (%p298) target = $region20
      $region19: #{unet_block_forward.1} parent=11 // pred_region
        _
      $region20: #{unet_block_forward.1} parent=11 // pred_fallthru
        _
      // Predicated region
      $region21: #{unet_block_forward.1} parent=11 // pred_check
        %p301 = pneg %p147
      $region22: #{unet_block_forward.1} parent=11 // pred_check_branch
        %303 = sbr.rel (%p301) target = $region24
      $region23: #{unet_block_forward.1} parent=11 // pred_region
        _
      $region24: #{unet_block_forward.1} parent=11 // pred_fallthru
        _
      // Predicated region
      $region25: #{unet_block_forward.1} parent=11 // pred_check
        %p304 = pneg %p168
      $region26: #{unet_block_forward.1} parent=11 // pred_check_branch
        %306 = sbr.rel (%p304) target = $region28
      $region27: #{unet_block_forward.1} parent=11 // pred_region
        _
      $region28: #{unet_block_forward.1} parent=11 // pred_fallthru
        _
    $region12: #{unet_block_forward.1} parent=5 // pred_fallthru
      _
    %p307 = scmp.lt.s32.totalorder %s16, 2
    // Predicated region
    $region29: #{unet_block_forward.1} parent=5 // pred_check
      %p308 = pneg %p307
    $region30: #{unet_block_forward.1} parent=5 // pred_check_branch
      %310 = sbr.rel (%p308) target = $region32
    $region31: #{unet_block_forward.1} parent=5 // pred_region
      // Predicated region
      $region33: #{unet_block_forward.1} parent=31 // pred_check
        %p311 = pneg %p50
      $region34: #{unet_block_forward.1} parent=31 // pred_check_branch
        %313 = sbr.rel (%p311) target = $region36
      $region35: #{unet_block_forward.1} parent=31 // pred_region
        %p314 = scmp.lt.s32.totalorder %s23, 1
        %s315 = scalar_select %p314, %s23, 1
        %p316 = scmp.lt.s32.totalorder %s24, 0
        %s317 = scalar_select %p316, %s24, 0
        %s318 = sadd.s32 %s317, %s315
        %s319 = smul.addr %s318, 4
        %s320 = scalar_lea.vmem %s0, %s319
      $region36: #{unet_block_forward.1} parent=31 // pred_fallthru
        _
      // Predicated region
      $region37: #{unet_block_forward.1} parent=31 // pred_check
        %p321 = pneg %p78
      $region38: #{unet_block_forward.1} parent=31 // pred_check_branch
        %323 = sbr.rel (%p321) target = $region40
      $region39: #{unet_block_forward.1} parent=31 // pred_region
        %s324 = smul.u32 2, %s24
        %p325 = scmp.lt.s32.totalorder %s23, 1
        %s326 = scalar_select %p325, %s23, 1
        %p327 = scmp.lt.s32.totalorder %s324, 1
        %s328 = scalar_select %p327, %s324, 1
        %s329 = smul.addr %s326, 2
        %s330 = sadd.s32 %s328, %s329
        %s331 = smul.addr %s330, 4
        %s332 = scalar_lea.vmem %s1, %s331
        %s333 = smul.u32 2, %s24
      $region40: #{unet_block_forward.1} parent=31 // pred_fallthru
        _
    $region32: #{unet_block_forward.1} parent=5 // pred_fallthru
      _
    %p334 = scmp.le.s32.totalorder 1, %s16
    %p335 = scmp.lt.s32.totalorder %s16, 3
    %p336 = pnand %p334, %p335
    %p337 = pneg %p336
    // Predicated region
    $region41: #{unet_block_forward.1} parent=5 // pred_check
      _
    $region42: #{unet_block_forward.1} parent=5 // pred_check_branch
      %339 = sbr.rel (%p336) target = $region44
    $region43: #{unet_block_forward.1} parent=5 // pred_region
      %s340 = ssub.s32 %s16, 1
      %p341 = scmp.lt.s32.totalorder %s25, 1
      %s342 = scalar_select %p341, %s25, 1
      %p343 = scmp.lt.s32.totalorder %s26, 0
      %s344 = scalar_select %p343, %s26, 0
      %s345 = sadd.s32 %s344, %s342
      %s346 = smul.addr %s345, 4
      %s347 = scalar_lea.vmem %s0, %s346
      %p348 = pneg %p56
      %p349 = pneg %p53
      %s350 = smul.u32 2, %s26
      %p351 = scmp.lt.s32.totalorder %s25, 1
      %s352 = scalar_select %p351, %s25, 1
      %p353 = scmp.lt.s32.totalorder %s350, 1
      %s354 = scalar_select %p353, %s350, 1
      %s355 = smul.addr %s352, 2
      %s356 = sadd.s32 %s354, %s355
      %s357 = smul.addr %s356, 4
      %s358 = scalar_lea.vmem %s1, %s357
      %p359 = pneg %p84
      %p360 = pneg %p81
      %p361 = pneg %p105
      %p362 = pneg %p102
      %p363 = pneg %p126
      %p364 = pneg %p123
      %p365 = pneg %p147
      %p366 = pneg %p144
      %p367 = pneg %p168
      %p368 = pneg %p165
      %p369 = pneg %p196
      %p370 = pneg %p193
      %p371 = scmp.lt.s32.totalorder %s25, 1
      %s372 = scalar_select %p371, %s25, 1
      %p373 = scmp.lt.s32.totalorder %s26, 0
      %s374 = scalar_select %p373, %s26, 0
      %s375 = smul.addr %s372, 2
      %s376 = sadd.s32 %s374, %s375
      %s377 = smul.addr %s376, 8
      %s378 = scalar_lea.vmem %s6, %s377
      %p379 = pneg %p224
      %p380 = pneg %p221
      %s381 = smul.u32 2, %s26
      %p382 = scmp.lt.s32.totalorder %s25, 1
      %s383 = scalar_select %p382, %s25, 1
      %p384 = scmp.lt.s32.totalorder %s381, 1
      %s385 = scalar_select %p384, %s381, 1
      %s386 = smul.addr %s383, 2
      %s387 = sadd.s32 %s385, %s386
      %s388 = smul.addr %s387, 4
      %s389 = scalar_lea.vmem %s7, %s388
      %p390 = pneg %p252
      %p391 = pneg %p249
      %p392 = scmp.lt.s32.totalorder %s25, 1
      %s393 = scalar_select %p392, %s25, 1
      %p394 = scmp.lt.s32.totalorder %s26, 0
      %s395 = scalar_select %p394, %s26, 0
      %s396 = smul.addr %s395, 2
      %s397 = smul.addr %s393, 2
      %s398 = sadd.s32 %s396, %s397
      %s399 = smul.addr %s398, 8
      %s400 = scalar_lea.vmem %s8, %s399
      %p401 = pneg %p280
      %p402 = pneg %p277
      %p403 = scmp.lt.s32.totalorder %s25, 1
      %s404 = scalar_select %p403, %s25, 1
      %p405 = scmp.lt.s32.totalorder %s26, 0
      %s406 = scalar_select %p405, %s26, 0
      %s407 = sadd.s32 %s406, %s404
      %s408 = smul.addr %s407, 4
      %s409 = scalar_lea.vmem %s9, %s408
      %p410 = scmp.lt.s32.totalorder %s25, 1
      %s411 = scalar_select %p410, %s25, 1
      %p412 = scmp.lt.s32.totalorder %s26, 0
      %s413 = scalar_select %p412, %s26, 0
      %s414 = sadd.s32 %s413, %s411
      %s415 = smul.addr %s414, 4
      %s416 = scalar_lea.vmem %s0, %s415
      %s417 = smul.u32 2, %s26
      %p418 = scmp.lt.s32.totalorder %s25, 1
      %s419 = scalar_select %p418, %s25, 1
      %p420 = scmp.lt.s32.totalorder %s417, 1
      %s421 = scalar_select %p420, %s417, 1
      %s422 = smul.addr %s419, 2
      %s423 = sadd.s32 %s421, %s422
      %s424 = smul.addr %s423, 4
      %s425 = scalar_lea.vmem %s1, %s424
      %s426 = smul.u32 2, %s26
      %p427 = scmp.lt.s32.totalorder %s25, 1
      %s428 = scalar_select %p427, %s25, 1
      %p429 = scmp.lt.s32.totalorder %s26, 0
      %s430 = scalar_select %p429, %s26, 0
      %s431 = smul.addr %s428, 2
      %s432 = sadd.s32 %s430, %s431
      %s433 = smul.addr %s432, 8
      %s434 = scalar_lea.vmem %s6, %s433
      %s435 = smul.u32 2, %s26
      %p436 = scmp.lt.s32.totalorder %s25, 1
      %s437 = scalar_select %p436, %s25, 1
      %p438 = scmp.lt.s32.totalorder %s435, 1
      %s439 = scalar_select %p438, %s435, 1
      %s440 = smul.addr %s437, 2
      %s441 = sadd.s32 %s439, %s440
      %s442 = smul.addr %s441, 4
      %s443 = scalar_lea.vmem %s7, %s442
      %s444 = smul.u32 2, %s26
      %p445 = scmp.lt.s32.totalorder %s25, 1
      %s446 = scalar_select %p445, %s25, 1
      %p447 = scmp.lt.s32.totalorder %s26, 0
      %s448 = scalar_select %p447, %s26, 0
      %s449 = smul.addr %s448, 2
      %s450 = smul.addr %s446, 2
      %s451 = sadd.s32 %s449, %s450
      %s452 = smul.addr %s451, 8
      %s453 = scalar_lea.vmem %s8, %s452
      %p454 = scmp.lt.s32.totalorder %s25, 1
      %s455 = scalar_select %p454, %s25, 1
      %p456 = scmp.lt.s32.totalorder %s26, 0
      %s457 = scalar_select %p456, %s26, 0
      %s458 = sadd.s32 %s457, %s455
      %s459 = smul.addr %s458, 4
      %s460 = scalar_lea.vmem %s9, %s459
      %v461 = vld [vmem:[%s2] sm:$0xff]
      %v462 = vld [vmem:[%s2 + $0x8] sm:$0xff]
      %v463 = vld [vmem:[%s416] sm:$0xf]
      %v464 = vld [vmem:[%s3] sm:$0xff]
      %v465 = vld [vmem:[%s3 + $0x8] sm:$0xff]
      %467 = vset.pattern.permute.xlu0 0
      %468 = vperm.xlu0 %467, %v464
      %v469 = vpop.permute.xlu0 %468
      %472 = vset.pattern.permute.xlu0 0
      %473 = vperm.xlu0 %472, %v465
      %v474 = vpop.permute.xlu0 %473
      %vm476 = vcmask 31744
      %v478 = vsel %vm476, %v461, 0
      %v481 = vsel %vm476, %v462, 0
      %vm483 = vcmask 1043456
      %v485 = vsel %vm483, %v463, 0
      %487 = vmatprep.subr.mxu0 0.0
      %488 = vmatpush1.msra.mxu0 %v485
      %489 = vmatprep.subr.mxu0 0.0
      %490 = vmatpush1.msra.mxu0 0.0
      %491 = vmatprep.subr.mxu0 0.0
      %492 = vmatpush1.msra.mxu0 0.0
      %493 = vmatprep.subr.mxu0 0.0
      %494 = vmatpush1.msra.mxu0 0.0
      %495 = vmatprep.subr.mxu0 0.0
      %496 = vmatpush1.msra.mxu0 0.0
      %497 = vmatprep.subr.mxu0 0.0
      %498 = vmatpush1.msra.mxu0 0.0
      %499 = vmatprep.subr.mxu0 0.0
      %500 = vmatpush1.msra.mxu0 0.0
      %501 = vmatprep.subr.mxu0 0.0
      %502 = vmatpush1.msra.mxu0 0.0
      %503 = vmatprep.subr.mxu0 0.0
      %504 = vmatpush1.msra.mxu0 0.0
      %505 = vmatprep.subr.mxu0 0.0
      %506 = vmatpush1.msra.mxu0 0.0
      %507 = vmatprep.subr.mxu0 0.0
      %508 = vmatpush1.msra.mxu0 0.0
      %509 = vmatprep.subr.mxu0 0.0
      %510 = vmatpush1.msra.mxu0 0.0
      %511 = vmatprep.subr.mxu0 0.0
      %512 = vmatpush1.msra.mxu0 0.0
      %513 = vmatprep.subr.mxu0 0.0
      %514 = vmatpush1.msra.mxu0 0.0
      %515 = vmatprep.subr.mxu0 0.0
      %516 = vmatpush1.msra.mxu0 0.0
      %517 = vmatprep.subr.mxu0 0.0
      %518 = vmatpush1.msra.mxu0 0.0
      %519 = vmatprep.subr.mxu0 0.0
      %520 = vmatpush1.msra.mxu0 0.0
      %521 = vmatprep.subr.mxu0 0.0
      %522 = vmatpush1.msra.mxu0 0.0
      %523 = vmatprep.subr.mxu0 0.0
      %524 = vmatpush1.msra.mxu0 0.0
      %525 = vmatprep.subr.mxu0 0.0
      %526 = vmatpush1.msra.mxu0 0.0
      %527 = vmatprep.subr.mxu0 0.0
      %528 = vmatpush1.msra.mxu0 0.0
      %529 = vmatprep.subr.mxu0 0.0
      %530 = vmatpush1.msra.mxu0 0.0
      %531 = vmatprep.subr.mxu0 0.0
      %532 = vmatpush1.msra.mxu0 0.0
      %533 = vmatprep.subr.mxu0 0.0
      %534 = vmatpush1.msra.mxu0 0.0
      %535 = vmatprep.subr.mxu0 0.0
      %536 = vmatpush1.msra.mxu0 0.0
      %537 = vmatprep.subr.mxu0 0.0
      %538 = vmatpush1.msra.mxu0 0.0
      %539 = vmatprep.subr.mxu0 0.0
      %540 = vmatpush1.msra.mxu0 0.0
      %541 = vmatprep.subr.mxu0 0.0
      %542 = vmatpush1.msra.mxu0 0.0
      %543 = vmatprep.subr.mxu0 0.0
      %544 = vmatpush1.msra.mxu0 0.0
      %545 = vmatprep.subr.mxu0 0.0
      %546 = vmatpush1.msra.mxu0 0.0
      %547 = vmatprep.subr.mxu0 0.0
      %548 = vmatpush1.msra.mxu0 0.0
      %549 = vmatprep.subr.mxu0 0.0
      %550 = vmatpush1.msra.mxu0 0.0
      %551 = vmatprep.mubr.f32.mxu0 0.0
      %552 = vmatmul.mubr.f32.gmra.mrb[0].mxu0 %v478
      %v553 = vpop.f32.mrb[0].mxu0
      %v554 = vadd.f32 %v469, %v553
      %v555 = vpop.f32.mrb[0].mxu0
      %556 = vmatprep.mubr.f32.mxu0 0.0
      %557 = vmatmul.mubr.f32.gmra.mrb[0].mxu0 %v481
      %v558 = vpop.f32.mrb[0].mxu0
      %v559 = vadd.f32 %v474, %v558
      %v560 = vpop.f32.mrb[0].mxu0
      %561 = vdwg.mxu0
      %v562 = vmax.f32 %v554, 0.0
      %v563 = vmax.f32 %v559, 0.0
      %vm564 = vcmask 523264
      %565 = vst.msk [vmem:[%s434] sm:$0xff] %vm564, %v562
      %566 = vst.msk [vmem:[%s434 + $0x8] sm:$0xff] %vm564, %v563
      %v567 = vsel %vm564, %v562, 0.0
      %568 = vadd.xlane.f32.xlu0 %v567
      %v569 = vpop.xlane.xlu0 %568
      %v570 = vsel %vm564, %v563, 0.0
      %571 = vadd.xlane.f32.xlu0 %v570
      %v572 = vpop.xlane.xlu0 %571
      %vm573 = vcmask 7168
      %574 = vst.msk [vmem:[%s453] sm:$0xff] %vm573, %v569
      %575 = vst.msk [vmem:[%s453 + $0x8] sm:$0xff] %vm573, %v572
      %v576 = vmul.f32 %v562, %v562
      %v577 = vmul.f32 %v563, %v563
      %v578 = vsel %vm564, %v576, 0.0
      %579 = vadd.xlane.f32.xlu0 %v578
      %v580 = vpop.xlane.xlu0 %579
      %v581 = vsel %vm564, %v577, 0.0
      %582 = vadd.xlane.f32.xlu0 %v581
      %v583 = vpop.xlane.xlu0 %582
      %vm584 = vcmask 15368
      %585 = vst.msk [vmem:[%s453] sm:$0xff] %vm584, %v580
      %586 = vst.msk [vmem:[%s453 + $0x8] sm:$0xff] %vm584, %v583
      %v587 = vld [vmem:[%s4] sm:$0xf]
      %v588 = vld [vmem:[%s425] sm:$0x77]
      %v589 = vld [vmem:[%s5] sm:$0xf]
      %591 = vset.pattern.permute.xlu0 0
      %592 = vperm.xlu0 %591, %v589
      %v593 = vpop.permute.xlu0 %592
      %v596 = vcombine.high %v588, %v588
      %vm597 = vcmask 23552
      %v599 = vsel %vm597, %v587, 0
      %vm601 = vcmask 1042432
      %v602 = vsel %vm601, %v588, 0
      %v604 = vsel %vm601, %v596, 0
      %606 = vmatprep.subr.mxu0 %v604
      %607 = vmatpush1.msra.mxu0 %v602
      %608 = vmatprep.subr.mxu0 0.0
      %609 = vmatpush1.msra.mxu0 0.0
      %610 = vmatprep.subr.mxu0 0.0
      %611 = vmatpush1.msra.mxu0 0.0
      %612 = vmatprep.subr.mxu0 0.0
      %613 = vmatpush1.msra.mxu0 0.0
      %614 = vmatprep.subr.mxu0 0.0
      %615 = vmatpush1.msra.mxu0 0.0
      %616 = vmatprep.subr.mxu0 0.0
      %617 = vmatpush1.msra.mxu0 0.0
      %618 = vmatprep.subr.mxu0 0.0
      %619 = vmatpush1.msra.mxu0 0.0
      %620 = vmatprep.subr.mxu0 0.0
      %621 = vmatpush1.msra.mxu0 0.0
      %622 = vmatprep.subr.mxu0 0.0
      %623 = vmatpush1.msra.mxu0 0.0
      %624 = vmatprep.subr.mxu0 0.0
      %625 = vmatpush1.msra.mxu0 0.0
      %626 = vmatprep.subr.mxu0 0.0
      %627 = vmatpush1.msra.mxu0 0.0
      %628 = vmatprep.subr.mxu0 0.0
      %629 = vmatpush1.msra.mxu0 0.0
      %630 = vmatprep.subr.mxu0 0.0
      %631 = vmatpush1.msra.mxu0 0.0
      %632 = vmatprep.subr.mxu0 0.0
      %633 = vmatpush1.msra.mxu0 0.0
      %634 = vmatprep.subr.mxu0 0.0
      %635 = vmatpush1.msra.mxu0 0.0
      %636 = vmatprep.subr.mxu0 0.0
      %637 = vmatpush1.msra.mxu0 0.0
      %638 = vmatprep.subr.mxu0 0.0
      %639 = vmatpush1.msra.mxu0 0.0
      %640 = vmatprep.subr.mxu0 0.0
      %641 = vmatpush1.msra.mxu0 0.0
      %642 = vmatprep.subr.mxu0 0.0
      %643 = vmatpush1.msra.mxu0 0.0
      %644 = vmatprep.subr.mxu0 0.0
      %645 = vmatpush1.msra.mxu0 0.0
      %646 = vmatprep.subr.mxu0 0.0
      %647 = vmatpush1.msra.mxu0 0.0
      %648 = vmatprep.subr.mxu0 0.0
      %649 = vmatpush1.msra.mxu0 0.0
      %650 = vmatprep.subr.mxu0 0.0
      %651 = vmatpush1.msra.mxu0 0.0
      %652 = vmatprep.subr.mxu0 0.0
      %653 = vmatpush1.msra.mxu0 0.0
      %654 = vmatprep.subr.mxu0 0.0
      %655 = vmatpush1.msra.mxu0 0.0
      %656 = vmatprep.subr.mxu0 0.0
      %657 = vmatpush1.msra.mxu0 0.0
      %658 = vmatprep.subr.mxu0 0.0
      %659 = vmatpush1.msra.mxu0 0.0
      %660 = vmatprep.subr.mxu0 0.0
      %661 = vmatpush1.msra.mxu0 0.0
      %662 = vmatprep.subr.mxu0 0.0
      %663 = vmatpush1.msra.mxu0 0.0
      %664 = vmatprep.subr.mxu0 0.0
      %665 = vmatpush1.msra.mxu0 0.0
      %666 = vmatprep.subr.mxu0 0.0
      %667 = vmatpush1.msra.mxu0 0.0
      %668 = vmatprep.subr.mxu0 0.0
      %669 = vmatpush1.msra.mxu0 0.0
      %670 = vmatprep.mubr.f32.mxu0 0.0
      %671 = vmatmul.mubr.f32.gmra.mrb[0].mxu0 %v599
      %v672 = vpop.f32.mrb[0].mxu0
      %v673 = vadd.f32 %v593, %v672
      %v674 = vpop.f32.mrb[0].mxu0
      %v675 = vadd.f32 %v593, %v674
      %676 = vdwg.mxu0
      %v677 = vmax.f32 %v673, 0.0
      %v678 = vmax.f32 %v675, 0.0
      %v681 = vcombine.low %v677, %v678
      %683 = vst [vmem:[%s443] sm:$0xff] %v681
      %v684 = vsel %vm483, %v677, 0.0
      %v685 = vsel %vm483, %v678, 0.0
      %v686 = vadd.f32 %v684, %v685
      %687 = vadd.xlane.f32.xlu0 %v686
      %v688 = vpop.xlane.xlu0 %687
      %vm689 = vcmask 3072
      %690 = vst.msk [vmem:[%s460] sm:$0xf] %vm689, %v688
      %v691 = vmul.f32 %v677, %v677
      %v692 = vmul.f32 %v678, %v678
      %v693 = vsel %vm483, %v691, 0.0
      %v694 = vsel %vm483, %v692, 0.0
      %v695 = vadd.f32 %v693, %v694
      %696 = vadd.xlane.f32.xlu0 %v695
      %v697 = vpop.xlane.xlu0 %696
      %vm698 = vcmask 11272
      %699 = vst.msk [vmem:[%s460] sm:$0xf] %vm698, %v697
      %p700 = scmp.lt.s32.totalorder %s25, 1
      %s701 = scalar_select %p700, %s25, 1
      %p702 = scmp.lt.s32.totalorder %s26, 0
      %s703 = scalar_select %p702, %s26, 0
      %s704 = smul.addr %s701, 2
      %s705 = sadd.s32 %s703, %s704
      %s706 = smul.addr %s705, 8
      %s707 = scalar_lea.vmem %s6, %s706
      %s708 = smul.u32 2, %s26
      %p709 = scmp.lt.s32.totalorder %s25, 1
      %s710 = scalar_select %p709, %s25, 1
      %p711 = scmp.lt.s32.totalorder %s708, 1
      %s712 = scalar_select %p711, %s708, 1
      %s713 = smul.addr %s710, 2
      %s714 = sadd.s32 %s712, %s713
      %s715 = smul.addr %s714, 4
      %s716 = scalar_lea.vmem %s7, %s715
      %p717 = scmp.lt.s32.totalorder %s25, 1
      %s718 = scalar_select %p717, %s25, 1
      %p719 = scmp.lt.s32.totalorder %s26, 0
      %s720 = scalar_select %p719, %s26, 0
      %s721 = smul.addr %s720, 2
      %s722 = smul.addr %s718, 2
      %s723 = sadd.s32 %s721, %s722
      %s724 = smul.addr %s723, 8
      %s725 = scalar_lea.vmem %s8, %s724
      %p726 = scmp.lt.s32.totalorder %s25, 1
      %s727 = scalar_select %p726, %s25, 1
      %p728 = scmp.lt.s32.totalorder %s26, 0
      %s729 = scalar_select %p728, %s26, 0
      %s730 = sadd.s32 %s729, %s727
      %s731 = smul.addr %s730, 4
      %s732 = scalar_lea.vmem %s9, %s731
      // Predicated region
      $region45: #{unet_block_forward.1} parent=43 // pred_check
        %p733 = pneg %p193
      $region46: #{unet_block_forward.1} parent=43 // pred_check_branch
        %735 = sbr.rel (%p733) target = $region48
      $region47: #{unet_block_forward.1} parent=43 // pred_region
        _
      $region48: #{unet_block_forward.1} parent=43 // pred_fallthru
        _
      // Predicated region
      $region49: #{unet_block_forward.1} parent=43 // pred_check
        %p736 = pneg %p221
      $region50: #{unet_block_forward.1} parent=43 // pred_check_branch
        %738 = sbr.rel (%p736) target = $region52
      $region51: #{unet_block_forward.1} parent=43 // pred_region
        %s739 = smul.u32 2, %s26
      $region52: #{unet_block_forward.1} parent=43 // pred_fallthru
        _
      // Predicated region
      $region53: #{unet_block_forward.1} parent=43 // pred_check
        %p740 = pneg %p249
      $region54: #{unet_block_forward.1} parent=43 // pred_check_branch
        %742 = sbr.rel (%p740) target = $region56
      $region55: #{unet_block_forward.1} parent=43 // pred_region
        _
      $region56: #{unet_block_forward.1} parent=43 // pred_fallthru
        _
      // Predicated region
      $region57: #{unet_block_forward.1} parent=43 // pred_check
        %p743 = pneg %p277
      $region58: #{unet_block_forward.1} parent=43 // pred_check_branch
        %745 = sbr.rel (%p743) target = $region60
      $region59: #{unet_block_forward.1} parent=43 // pred_region
        _
      $region60: #{unet_block_forward.1} parent=43 // pred_fallthru
        _
    $region44: #{unet_block_forward.1} parent=5 // pred_fallthru
      _
    %p746 = scmp.le.s32.totalorder 2, %s16
    // Predicated region
    $region61: #{unet_block_forward.1} parent=5 // pred_check
      %p747 = pneg %p746
    $region62: #{unet_block_forward.1} parent=5 // pred_check_branch
      %749 = sbr.rel (%p747) target = $region64
    $region63: #{unet_block_forward.1} parent=5 // pred_region
      %s750 = ssub.s32 %s16, 2
      // Predicated region
      $region65: #{unet_block_forward.1} parent=63 // pred_check
        %p751 = pneg %p199
      $region66: #{unet_block_forward.1} parent=63 // pred_check_branch
        %753 = sbr.rel (%p751) target = $region68
      $region67: #{unet_block_forward.1} parent=63 // pred_region
        %p754 = scmp.lt.s32.totalorder %s27, 1
        %s755 = scalar_select %p754, %s27, 1
        %p756 = scmp.lt.s32.totalorder %s28, 0
        %s757 = scalar_select %p756, %s28, 0
        %s758 = smul.addr %s755, 2
        %s759 = sadd.s32 %s757, %s758
        %s760 = smul.addr %s759, 8
        %s761 = scalar_lea.vmem %s6, %s760
      $region68: #{unet_block_forward.1} parent=63 // pred_fallthru
        _
      // Predicated region
      $region69: #{unet_block_forward.1} parent=63 // pred_check
        %p762 = pneg %p227
      $region70: #{unet_block_forward.1} parent=63 // pred_check_branch
        %764 = sbr.rel (%p762) target = $region72
      $region71: #{unet_block_forward.1} parent=63 // pred_region
        %s765 = smul.u32 2, %s28
        %p766 = scmp.lt.s32.totalorder %s27, 1
        %s767 = scalar_select %p766, %s27, 1
        %p768 = scmp.lt.s32.totalorder %s765, 1
        %s769 = scalar_select %p768, %s765, 1
        %s770 = smul.addr %s767, 2
        %s771 = sadd.s32 %s769, %s770
        %s772 = smul.addr %s771, 4
        %s773 = scalar_lea.vmem %s7, %s772
      $region72: #{unet_block_forward.1} parent=63 // pred_fallthru
        _
      // Predicated region
      $region73: #{unet_block_forward.1} parent=63 // pred_check
        %p774 = pneg %p255
      $region74: #{unet_block_forward.1} parent=63 // pred_check_branch
        %776 = sbr.rel (%p774) target = $region76
      $region75: #{unet_block_forward.1} parent=63 // pred_region
        %p777 = scmp.lt.s32.totalorder %s27, 1
        %s778 = scalar_select %p777, %s27, 1
        %p779 = scmp.lt.s32.totalorder %s28, 0
        %s780 = scalar_select %p779, %s28, 0
        %s781 = smul.addr %s780, 2
        %s782 = smul.addr %s778, 2
        %s783 = sadd.s32 %s781, %s782
        %s784 = smul.addr %s783, 8
        %s785 = scalar_lea.vmem %s8, %s784
      $region76: #{unet_block_forward.1} parent=63 // pred_fallthru
        _
      // Predicated region
      $region77: #{unet_block_forward.1} parent=63 // pred_check
        %p786 = pneg %p283
      $region78: #{unet_block_forward.1} parent=63 // pred_check_branch
        %788 = sbr.rel (%p786) target = $region80
      $region79: #{unet_block_forward.1} parent=63 // pred_region
        %p789 = scmp.lt.s32.totalorder %s27, 1
        %s790 = scalar_select %p789, %s27, 1
        %p791 = scmp.lt.s32.totalorder %s28, 0
        %s792 = scalar_select %p791, %s28, 0
        %s793 = sadd.s32 %s792, %s790
        %s794 = smul.addr %s793, 4
        %s795 = scalar_lea.vmem %s9, %s794
      $region80: #{unet_block_forward.1} parent=63 // pred_fallthru
        _
    $region64: #{unet_block_forward.1} parent=5 // pred_fallthru
      _
  $region6: #{unet_block_forward.1} parent=0 // loop_footer
    %s20 = sadd.s32 1, %s16
  $region7: #{unet_block_forward.1} parent=0 // loop_footer_branch
    %15 = sbr.rel target = $region3
  $region8: #{unet_block_forward.1} parent=0 // loop_exit
    _

</llo_original>
